<compile_context>
chip_gen: v6e
topology: v6e:2x2x1
jax: 0.10.0
libtpu: 0.0.40
codegen_flags: <defaults>
</compile_context>

<pallas_src>
import functools

import jax
import jax.numpy as jnp
import numpy as np
from jax.experimental import pallas as pl
from jax.experimental.pallas import tpu as pltpu


# ----------------------------------------------------------------------------
# Model hyper-parameters (small, consistent with the module's constructor)
# ----------------------------------------------------------------------------
INPUT_DIM = 16
HIDDEN_DIMS = (32, 32)
OUTPUT_DIM = 4
BATCH = 8
BATCH_LARGE = 256          # exercises the batch-blocked ("parallel") grid path
INIT_SCALING = 2.0
LANE = 128                 # TPU lane width: every layer is padded to 128 lanes


# ----------------------------------------------------------------------------
# Pallas kernel: whole MLP fused.
#   x_ref : (Bblk, 128)        lane-dense input, lane 127 carries constant 1.0
#   w_ref : (L, 128, 128)      per-layer padded W^T with bias folded into row 127
#   o_ref : (Bblk, 128)        lane-dense output (wrapper slices to output_dim)
# Bias is applied by the matmul itself: h[:,127] == 1, w[127, :out] == bias.
# ----------------------------------------------------------------------------
def _mlp_kernel(x_ref, w_ref, o_ref):
    n_layers = w_ref.shape[0]                      # static
    h = x_ref[...]                                 # (Bblk, 128)
    for i in range(n_layers):                      # static layer loop
        h = jnp.dot(h, w_ref[i], preferred_element_type=jnp.float32)
        if i < n_layers - 1:                       # ReLU on hidden layers only
            h = jnp.maximum(h, 0.0)                # ReLU(1)=1 keeps bias lane alive
    o_ref[...] = h                                 # single unmasked lane-dense store


# ----------------------------------------------------------------------------
# One-time parameter packing (init time, NOT inside the jitted forward).
# Produces a single (L, 128, 128) f32 slab:
#   slab[i, :in_d,  :out_d] = W_i^T
#   slab[i, 127,    :out_d] = b_i            (driven by the constant-1 lane)
#   slab[i, 127, 127]       = 1.0            (hidden layers: carry the 1 forward)
# Padded lanes stay exactly 0, so ReLU keeps them 0 and zero weight rows of the
# next layer contribute nothing.
# ----------------------------------------------------------------------------
def pack_params(params):
    n = len(params)
    slab = np.zeros((n, LANE, LANE), np.float32)
    for i, (W, b) in enumerate(params):
        W = np.asarray(W, np.float32)              # (out, in), PyTorch layout
        b = np.asarray(b, np.float32)              # (out,)
        out_d, in_d = W.shape
        assert in_d < LANE and out_d < LANE, "bias lane (127) must stay free"
        slab[i, :in_d, :out_d] = W.T
        slab[i, LANE - 1, :out_d] = b
        if i < n - 1:
            slab[i, LANE - 1, LANE - 1] = 1.0
    return jnp.asarray(slab)


# ----------------------------------------------------------------------------
# Forward: pad x to a lane-dense slab (lane 127 = 1.0), single pallas_call.
# Gridless for tiny batches; batch-blocked "parallel" grid for large batches
# (shards across v7x's two TensorCores; no-op on v5e/v6e).
# ----------------------------------------------------------------------------
@functools.partial(jax.jit, static_argnames=("out_dim", "block_b"))
def mlp_forward(x, w_slab, *, out_dim, block_b=None):
    B, in_dim = x.shape
    n_layers = w_slab.shape[0]
    x = x.astype(jnp.float32)

    # Lane-dense input: real features in lanes [0, in_dim), constant 1.0 in lane 127.
    xp = jnp.concatenate(
        [x,
         jnp.zeros((B, LANE - 1 - in_dim), jnp.float32),
         jnp.ones((B, 1), jnp.float32)],
        axis=1)                                                # (B, 128)

    if block_b is None or B <= block_b:
        # Tiny batch: single invocation, everything VMEM-resident, 2 input DMAs.
        vmem = pl.BlockSpec(memory_space=pltpu.MemorySpace.VMEM)
        out = pl.pallas_call(
            _mlp_kernel,
            out_shape=jax.ShapeDtypeStruct((B, LANE), jnp.float32),
            in_specs=[vmem, vmem],
            out_specs=vmem,
        )(xp, w_slab)
    else:
        # Large batch: block rows; weight slab stays resident (constant block index).
        assert B % block_b == 0
        out = pl.pallas_call(
            _mlp_kernel,
            out_shape=jax.ShapeDtypeStruct((B, LANE), jnp.float32),
            grid=(B // block_b,),
            in_specs=[
                pl.BlockSpec((block_b, LANE), lambda i: (i, 0)),
                pl.BlockSpec((n_layers, LANE, LANE), lambda i: (0, 0, 0)),
            ],
            out_specs=pl.BlockSpec((block_b, LANE), lambda i: (i, 0)),
            compiler_params=pltpu.CompilerParams(
                dimension_semantics=("parallel",)),
        )(xp, w_slab)

    return out[:, :out_dim]                                    # strip lane padding


# ----------------------------------------------------------------------------
# Deterministic parameter init, matching the nn.Module's shapes.
# Weights: kaiming_uniform_ (gain=sqrt(2) -> bound=sqrt(6/fan_in)) * init_scaling.
# Biases: nn.Linear default reset_parameters bound = 1/sqrt(fan_in).
# ----------------------------------------------------------------------------
def init_params(key):
    dims = (INPUT_DIM,) + tuple(HIDDEN_DIMS) + (OUTPUT_DIM,)
    params = []
    for i in range(len(dims) - 1):
        key, wk, bk = jax.random.split(key, 3)
        fan_in, fan_out = dims[i], dims[i + 1]
        w_bound = np.sqrt(6.0 / fan_in)
        W = jax.random.uniform(wk, (fan_out, fan_in), jnp.float32,
                               -w_bound, w_bound) * INIT_SCALING
        b_bound = 1.0 / np.sqrt(fan_in)
        b = jax.random.uniform(bk, (fan_out,), jnp.float32, -b_bound, b_bound)
        params.append((W, b))
    return tuple(params)


# ----------------------------------------------------------------------------
# Pure-JAX reference (mirrors the PyTorch Sequential exactly) for validation
# ----------------------------------------------------------------------------
def reference_forward(x, params):
    h = x
    n = len(params)
    for i, (W, b) in enumerate(params):
        h = h @ W.T + b
        if i < n - 1:
            h = jnp.maximum(h, 0.0)
    return h


if __name__ == "__main__":
    key = jax.random.PRNGKey(0)
    pkey, xkey, xkey2 = jax.random.split(key, 3)
    params = init_params(pkey)
    w_slab = pack_params(params)                   # one-time packing (not per-forward)

    # Tiny-batch (gridless) path.
    x = jax.random.normal(xkey, (BATCH, INPUT_DIM), jnp.float32)
    out = jax.block_until_ready(mlp_forward(x, w_slab, out_dim=OUTPUT_DIM))
    ref = jax.block_until_ready(reference_forward(x, params))
    np.testing.assert_allclose(np.asarray(out), np.asarray(ref), rtol=1e-4, atol=1e-4)

    # Large-batch, batch-blocked "parallel" grid path (2nd TensorCore on v7x).
    x_big = jax.random.normal(xkey2, (BATCH_LARGE, INPUT_DIM), jnp.float32)
    out_big = jax.block_until_ready(
        mlp_forward(x_big, w_slab, out_dim=OUTPUT_DIM, block_b=128))
    ref_big = jax.block_until_ready(reference_forward(x_big, params))
    np.testing.assert_allclose(np.asarray(out_big), np.asarray(ref_big),
                               rtol=1e-4, atol=1e-4)

    print("KERNEL_OK")
</pallas_src>

<mosaic_0001>
module attributes {stable_mosaic.version = 11 : i64} {
  func.func @_mlp_kernel(%arg0: memref<8x128xf32, #tpu.memory_space<vmem>>, %arg1: memref<3x128x128xf32, #tpu.memory_space<vmem>>, %arg2: memref<8x128xf32, #tpu.memory_space<vmem>>) attributes {dimension_semantics = [], scalar_prefetch = 0 : i64, scratch_operands = 0 : i64, tpu.core_type = #tpu.core_type<tc>} {
    %c0 = arith.constant 0 : index
    %c0_0 = arith.constant 0 : index
    %0 = vector.load %arg0[%c0, %c0_0] : memref<8x128xf32, #tpu.memory_space<vmem>>, vector<8x128xf32>
    %c0_1 = arith.constant 0 : index
    %c0_2 = arith.constant 0 : index
    %c0_3 = arith.constant 0 : index
    %1 = vector.load %arg1[%c0_1, %c0_2, %c0_3] : memref<3x128x128xf32, #tpu.memory_space<vmem>>, vector<1x128x128xf32>
    %2 = vector.shape_cast %1 : vector<1x128x128xf32> to vector<128x128xf32>
    %cst = arith.constant dense<0.000000e+00> : vector<8x128xf32>
    %3 = tpu.matmul %0, %2, %cst {dimension_numbers = #tpu.dot_dimension_numbers<[1], [0], [0], [1], [0, 0, 1, 1], [], []>} : vector<8x128xf32>, vector<128x128xf32>, vector<8x128xf32> -> vector<8x128xf32>
    %cst_4 = arith.constant 0.000000e+00 : f32
    %4 = vector.broadcast %cst_4 : f32 to vector<8x128xf32>
    %5 = arith.maximumf %3, %4 : vector<8x128xf32>
    %c1 = arith.constant 1 : index
    %c0_5 = arith.constant 0 : index
    %c0_6 = arith.constant 0 : index
    %6 = vector.load %arg1[%c1, %c0_5, %c0_6] : memref<3x128x128xf32, #tpu.memory_space<vmem>>, vector<1x128x128xf32>
    %7 = vector.shape_cast %6 : vector<1x128x128xf32> to vector<128x128xf32>
    %cst_7 = arith.constant dense<0.000000e+00> : vector<8x128xf32>
    %8 = tpu.matmul %5, %7, %cst_7 {dimension_numbers = #tpu.dot_dimension_numbers<[1], [0], [0], [1], [0, 0, 1, 1], [], []>} : vector<8x128xf32>, vector<128x128xf32>, vector<8x128xf32> -> vector<8x128xf32>
    %cst_8 = arith.constant 0.000000e+00 : f32
    %9 = vector.broadcast %cst_8 : f32 to vector<8x128xf32>
    %10 = arith.maximumf %8, %9 : vector<8x128xf32>
    %c2 = arith.constant 2 : index
    %c0_9 = arith.constant 0 : index
    %c0_10 = arith.constant 0 : index
    %11 = vector.load %arg1[%c2, %c0_9, %c0_10] : memref<3x128x128xf32, #tpu.memory_space<vmem>>, vector<1x128x128xf32>
    %12 = vector.shape_cast %11 : vector<1x128x128xf32> to vector<128x128xf32>
    %cst_11 = arith.constant dense<0.000000e+00> : vector<8x128xf32>
    %13 = tpu.matmul %10, %12, %cst_11 {dimension_numbers = #tpu.dot_dimension_numbers<[1], [0], [0], [1], [0, 0, 1, 1], [], []>} : vector<8x128xf32>, vector<128x128xf32>, vector<8x128xf32> -> vector<8x128xf32>
    %c0_12 = arith.constant 0 : index
    %c0_13 = arith.constant 0 : index
    %14 = vector.load %arg2[%c0_12, %c0_13] : memref<8x128xf32, #tpu.memory_space<vmem>>, vector<8x128xf32>
    tpu.vector_store %arg2[%c0_12, %c0_13], %13 {strides = array<i32>} : memref<8x128xf32, #tpu.memory_space<vmem>>, vector<8x128xf32>,
    return
  }
}

</mosaic_0001>

<llo_original>
// kernel: mlp_forward.1
$region0: #{mlp_forward.1}
  #allocation0 [shape = 'u32[]', space=smem, size = 0x4, offset = 0x4, fixed_abs, tag = 'smem constant byte address 0x4 - core index']
  #allocation1 [shape = 'u32[144,128]{1,0:T(1,128)}', space=vmem, size = 0x12000, scoped, tag = 'internal scratch']
  %s0 = inlined_call_operand.vmem [shape: f32[8,128], index: 0, kind: input, shape index: {}]
  %s1 = inlined_call_operand.hbm [shape: f32[3,128,128], index: 1, kind: input, shape index: {}]
  %s2 = inlined_call_operand.vmem [shape: f32[8,128], index: 2, kind: output, shape index: {}]
  %s3 = sld [smem:[#allocation0]]
  $region22: #{mlp_forward.1} parent=0
    _
  %s5 = ssub.s32 1, %s3
  %s6 = scalar_select 0, %s5, %s3
  $region1: #{mlp_forward.1} parent=0
    #allocation2 [shape = 'u8[196608]{0}', space=vmem, size = 0x30000, scoped, tag = 'input window, operand 1, single buffered']
    #allocation3 [shape = 's32[1]{0}', space=sflag, size = 0x4, scoped, tag = 'scoped memory for mlp_forward.1']
    %7 = vsyncpa [#allocation3], 0
    // Predicated region
    $region2: #{mlp_forward.1} parent=1 // pred_check
      _
    $region3: #{mlp_forward.1} parent=1 // pred_check_branch
      %9 = sbr.rel (0) target = $region5
    $region4: #{mlp_forward.1} parent=1 // pred_region
      _
    $region5: #{mlp_forward.1} parent=1 // pred_fallthru
      _
    // Predicated region
    $region6: #{mlp_forward.1} parent=1 // pred_check
      _
    $region7: #{mlp_forward.1} parent=1 // pred_check_branch
      %11 = sbr.rel (0) target = $region9
    $region8: #{mlp_forward.1} parent=1 // pred_region
      %s13 = ssub.s32 6144, 6144
      %14 = vsyncadd [#allocation3], %s13
      %s15 = sshll.u32 [#allocation2], 4
      %s16 = int_to_ptr.vmem [resolvable:$true] %s15
      %21 = dma.hbm_to_vmem [thread:$0]  %s1, 6144, %s16, [#allocation3], 128, 128, 8
    $region9: #{mlp_forward.1} parent=1 // pred_fallthru
      _
    // Predicated region
    $region10: #{mlp_forward.1} parent=1 // pred_check
      _
    $region11: #{mlp_forward.1} parent=1 // pred_check_branch
      %23 = sbr.rel (0) target = $region13
    $region12: #{mlp_forward.1} parent=1 // pred_region
      %24 = dma.done [#allocation3], 6144
    $region13: #{mlp_forward.1} parent=1 // pred_fallthru
      _
    %v25 = vld [vmem:[%s0] sm:$0xff]
    %v26 = vld [vmem:[#allocation2] sm:$0xff]
    %v27 = vld [vmem:[#allocation2 + $0x8] sm:$0xff]
    %v28 = vld [vmem:[#allocation2 + $0x10] sm:$0xff]
    %v29 = vld [vmem:[#allocation2 + $0x18] sm:$0xff]
    %v30 = vld [vmem:[#allocation2 + $0x20] sm:$0xff]
    %v31 = vld [vmem:[#allocation2 + $0x28] sm:$0xff]
    %v32 = vld [vmem:[#allocation2 + $0x30] sm:$0xff]
    %v33 = vld [vmem:[#allocation2 + $0x38] sm:$0xff]
    %v34 = vld [vmem:[#allocation2 + $0x40] sm:$0xff]
    %v35 = vld [vmem:[#allocation2 + $0x48] sm:$0xff]
    %v36 = vld [vmem:[#allocation2 + $0x50] sm:$0xff]
    %v37 = vld [vmem:[#allocation2 + $0x58] sm:$0xff]
    %v38 = vld [vmem:[#allocation2 + $0x60] sm:$0xff]
    %v39 = vld [vmem:[#allocation2 + $0x68] sm:$0xff]
    %v40 = vld [vmem:[#allocation2 + $0x70] sm:$0xff]
    %v41 = vld [vmem:[#allocation2 + $0x78] sm:$0xff]
    %42 = vmatprep.subr.mxu0 0.0
    %43 = vmatpush1.msra.mxu0 %v41
    %44 = vmatprep.subr.mxu0 0.0
    %45 = vmatpush1.msra.mxu0 %v40
    %46 = vmatprep.subr.mxu0 0.0
    %47 = vmatpush1.msra.mxu0 %v39
    %48 = vmatprep.subr.mxu0 0.0
    %49 = vmatpush1.msra.mxu0 %v38
    %50 = vmatprep.subr.mxu0 0.0
    %51 = vmatpush1.msra.mxu0 %v37
    %52 = vmatprep.subr.mxu0 0.0
    %53 = vmatpush1.msra.mxu0 %v36
    %54 = vmatprep.subr.mxu0 0.0
    %55 = vmatpush1.msra.mxu0 %v35
    %56 = vmatprep.subr.mxu0 0.0
    %57 = vmatpush1.msra.mxu0 %v34
    %58 = vmatprep.subr.mxu0 0.0
    %59 = vmatpush1.msra.mxu0 %v33
    %60 = vmatprep.subr.mxu0 0.0
    %61 = vmatpush1.msra.mxu0 %v32
    %62 = vmatprep.subr.mxu0 0.0
    %63 = vmatpush1.msra.mxu0 %v31
    %64 = vmatprep.subr.mxu0 0.0
    %65 = vmatpush1.msra.mxu0 %v30
    %66 = vmatprep.subr.mxu0 0.0
    %67 = vmatpush1.msra.mxu0 %v29
    %68 = vmatprep.subr.mxu0 0.0
    %69 = vmatpush1.msra.mxu0 %v28
    %70 = vmatprep.subr.mxu0 0.0
    %71 = vmatpush1.msra.mxu0 %v27
    %72 = vmatprep.subr.mxu0 0.0
    %73 = vmatpush1.msra.mxu0 %v26
    %74 = vmatprep.subr.mxu0 0.0
    %75 = vmatpush2.msra.mxu0 0.0
    %76 = vmatprep.subr.mxu0 0.0
    %77 = vmatpush2.msra.mxu0 0.0
    %78 = vmatprep.subr.mxu0 0.0
    %79 = vmatpush2.msra.mxu0 0.0
    %80 = vmatprep.subr.mxu0 0.0
    %81 = vmatpush2.msra.mxu0 0.0
    %82 = vmatprep.subr.mxu0 0.0
    %83 = vmatpush2.msra.mxu0 0.0
    %84 = vmatprep.subr.mxu0 0.0
    %85 = vmatpush2.msra.mxu0 0.0
    %86 = vmatprep.subr.mxu0 0.0
    %87 = vmatpush2.msra.mxu0 0.0
    %88 = vmatprep.subr.mxu0 0.0
    %89 = vmatpush2.msra.mxu0 0.0
    %90 = vmatprep.subr.mxu0 0.0
    %91 = vmatpush2.msra.mxu0 0.0
    %92 = vmatprep.subr.mxu0 0.0
    %93 = vmatpush2.msra.mxu0 0.0
    %94 = vmatprep.subr.mxu0 0.0
    %95 = vmatpush2.msra.mxu0 0.0
    %96 = vmatprep.subr.mxu0 0.0
    %97 = vmatpush2.msra.mxu0 0.0
    %98 = vmatprep.subr.mxu0 0.0
    %99 = vmatpush2.msra.mxu0 0.0
    %100 = vmatprep.subr.mxu0 0.0
    %101 = vmatpush2.msra.mxu0 0.0
    %102 = vmatprep.subr.mxu0 0.0
    %103 = vmatpush2.msra.mxu0 0.0
    %104 = vmatprep.subr.mxu0 0.0
    %105 = vmatpush2.msra.mxu0 0.0
    %106 = vmatprep.mubr.f32.mxu0 0.0
    %107 = vmatmul.mubr.f32.gmra.mxu0 %v25
    %v108 = vpop.f32.mrf.mxu0
    %v109 = vadd.f32 0.0, %v108
    %v110 = vpop.f32.mrf.mxu0
    %111 = vdwg.mxu0
    %v112 = vmax.f32 %v109, 0.0
    %s113 = scalar_lea.vmem [#allocation2], 128
    %v114 = vld [vmem:[%s113] sm:$0xff]
    %v115 = vld [vmem:[%s113 + $0x8] sm:$0xff]
    %v116 = vld [vmem:[%s113 + $0x10] sm:$0xff]
    %v117 = vld [vmem:[%s113 + $0x18] sm:$0xff]
    %v118 = vld [vmem:[%s113 + $0x20] sm:$0xff]
    %v119 = vld [vmem:[%s113 + $0x28] sm:$0xff]
    %v120 = vld [vmem:[%s113 + $0x30] sm:$0xff]
    %v121 = vld [vmem:[%s113 + $0x38] sm:$0xff]
    %v122 = vld [vmem:[%s113 + $0x40] sm:$0xff]
    %v123 = vld [vmem:[%s113 + $0x48] sm:$0xff]
    %v124 = vld [vmem:[%s113 + $0x50] sm:$0xff]
    %v125 = vld [vmem:[%s113 + $0x58] sm:$0xff]
    %v126 = vld [vmem:[%s113 + $0x60] sm:$0xff]
    %v127 = vld [vmem:[%s113 + $0x68] sm:$0xff]
    %v128 = vld [vmem:[%s113 + $0x70] sm:$0xff]
    %v129 = vld [vmem:[%s113 + $0x78] sm:$0xff]
    %130 = vmatprep.subr.mxu0 0.0
    %131 = vmatpush1.msra.mxu0 %v129
    %132 = vmatprep.subr.mxu0 0.0
    %133 = vmatpush1.msra.mxu0 %v128
    %134 = vmatprep.subr.mxu0 0.0
    %135 = vmatpush1.msra.mxu0 %v127
    %136 = vmatprep.subr.mxu0 0.0
    %137 = vmatpush1.msra.mxu0 %v126
    %138 = vmatprep.subr.mxu0 0.0
    %139 = vmatpush1.msra.mxu0 %v125
    %140 = vmatprep.subr.mxu0 0.0
    %141 = vmatpush1.msra.mxu0 %v124
    %142 = vmatprep.subr.mxu0 0.0
    %143 = vmatpush1.msra.mxu0 %v123
    %144 = vmatprep.subr.mxu0 0.0
    %145 = vmatpush1.msra.mxu0 %v122
    %146 = vmatprep.subr.mxu0 0.0
    %147 = vmatpush1.msra.mxu0 %v121
    %148 = vmatprep.subr.mxu0 0.0
    %149 = vmatpush1.msra.mxu0 %v120
    %150 = vmatprep.subr.mxu0 0.0
    %151 = vmatpush1.msra.mxu0 %v119
    %152 = vmatprep.subr.mxu0 0.0
    %153 = vmatpush1.msra.mxu0 %v118
    %154 = vmatprep.subr.mxu0 0.0
    %155 = vmatpush1.msra.mxu0 %v117
    %156 = vmatprep.subr.mxu0 0.0
    %157 = vmatpush1.msra.mxu0 %v116
    %158 = vmatprep.subr.mxu0 0.0
    %159 = vmatpush1.msra.mxu0 %v115
    %160 = vmatprep.subr.mxu0 0.0
    %161 = vmatpush1.msra.mxu0 %v114
    %162 = vmatprep.subr.mxu0 0.0
    %163 = vmatpush2.msra.mxu0 0.0
    %164 = vmatprep.subr.mxu0 0.0
    %165 = vmatpush2.msra.mxu0 0.0
    %166 = vmatprep.subr.mxu0 0.0
    %167 = vmatpush2.msra.mxu0 0.0
    %168 = vmatprep.subr.mxu0 0.0
    %169 = vmatpush2.msra.mxu0 0.0
    %170 = vmatprep.subr.mxu0 0.0
    %171 = vmatpush2.msra.mxu0 0.0
    %172 = vmatprep.subr.mxu0 0.0
    %173 = vmatpush2.msra.mxu0 0.0
    %174 = vmatprep.subr.mxu0 0.0
    %175 = vmatpush2.msra.mxu0 0.0
    %176 = vmatprep.subr.mxu0 0.0
    %177 = vmatpush2.msra.mxu0 0.0
    %178 = vmatprep.subr.mxu0 0.0
    %179 = vmatpush2.msra.mxu0 0.0
    %180 = vmatprep.subr.mxu0 0.0
    %181 = vmatpush2.msra.mxu0 0.0
    %182 = vmatprep.subr.mxu0 0.0
    %183 = vmatpush2.msra.mxu0 0.0
    %184 = vmatprep.subr.mxu0 0.0
    %185 = vmatpush2.msra.mxu0 0.0
    %186 = vmatprep.subr.mxu0 0.0
    %187 = vmatpush2.msra.mxu0 0.0
    %188 = vmatprep.subr.mxu0 0.0
    %189 = vmatpush2.msra.mxu0 0.0
    %190 = vmatprep.subr.mxu0 0.0
    %191 = vmatpush2.msra.mxu0 0.0
    %192 = vmatprep.subr.mxu0 0.0
    %193 = vmatpush2.msra.mxu0 0.0
    %194 = vmatprep.mubr.f32.mxu0 0.0
    %195 = vmatmul.mubr.f32.gmra.mxu0 %v112
    %v196 = vpop.f32.mrf.mxu0
    %v197 = vadd.f32 0.0, %v196
    %v198 = vpop.f32.mrf.mxu0
    %199 = vdwg.mxu0
    %v200 = vmax.f32 %v197, 0.0
    %s201 = scalar_lea.vmem [#allocation2], 256
    %v202 = vld [vmem:[%s201] sm:$0xff]
    %v203 = vld [vmem:[%s201 + $0x8] sm:$0xff]
    %v204 = vld [vmem:[%s201 + $0x10] sm:$0xff]
    %v205 = vld [vmem:[%s201 + $0x18] sm:$0xff]
    %v206 = vld [vmem:[%s201 + $0x20] sm:$0xff]
    %v207 = vld [vmem:[%s201 + $0x28] sm:$0xff]
    %v208 = vld [vmem:[%s201 + $0x30] sm:$0xff]
    %v209 = vld [vmem:[%s201 + $0x38] sm:$0xff]
    %v210 = vld [vmem:[%s201 + $0x40] sm:$0xff]
    %v211 = vld [vmem:[%s201 + $0x48] sm:$0xff]
    %v212 = vld [vmem:[%s201 + $0x50] sm:$0xff]
    %v213 = vld [vmem:[%s201 + $0x58] sm:$0xff]
    %v214 = vld [vmem:[%s201 + $0x60] sm:$0xff]
    %v215 = vld [vmem:[%s201 + $0x68] sm:$0xff]
    %v216 = vld [vmem:[%s201 + $0x70] sm:$0xff]
    %v217 = vld [vmem:[%s201 + $0x78] sm:$0xff]
    %218 = vmatprep.subr.mxu0 0.0
    %219 = vmatpush1.msra.mxu0 %v217
    %220 = vmatprep.subr.mxu0 0.0
    %221 = vmatpush1.msra.mxu0 %v216
    %222 = vmatprep.subr.mxu0 0.0
    %223 = vmatpush1.msra.mxu0 %v215
    %224 = vmatprep.subr.mxu0 0.0
    %225 = vmatpush1.msra.mxu0 %v214
    %226 = vmatprep.subr.mxu0 0.0
    %227 = vmatpush1.msra.mxu0 %v213
    %228 = vmatprep.subr.mxu0 0.0
    %229 = vmatpush1.msra.mxu0 %v212
    %230 = vmatprep.subr.mxu0 0.0
    %231 = vmatpush1.msra.mxu0 %v211
    %232 = vmatprep.subr.mxu0 0.0
    %233 = vmatpush1.msra.mxu0 %v210
    %234 = vmatprep.subr.mxu0 0.0
    %235 = vmatpush1.msra.mxu0 %v209
    %236 = vmatprep.subr.mxu0 0.0
    %237 = vmatpush1.msra.mxu0 %v208
    %238 = vmatprep.subr.mxu0 0.0
    %239 = vmatpush1.msra.mxu0 %v207
    %240 = vmatprep.subr.mxu0 0.0
    %241 = vmatpush1.msra.mxu0 %v206
    %242 = vmatprep.subr.mxu0 0.0
    %243 = vmatpush1.msra.mxu0 %v205
    %244 = vmatprep.subr.mxu0 0.0
    %245 = vmatpush1.msra.mxu0 %v204
    %246 = vmatprep.subr.mxu0 0.0
    %247 = vmatpush1.msra.mxu0 %v203
    %248 = vmatprep.subr.mxu0 0.0
    %249 = vmatpush1.msra.mxu0 %v202
    %250 = vmatprep.subr.mxu0 0.0
    %251 = vmatpush2.msra.mxu0 0.0
    %252 = vmatprep.subr.mxu0 0.0
    %253 = vmatpush2.msra.mxu0 0.0
    %254 = vmatprep.subr.mxu0 0.0
    %255 = vmatpush2.msra.mxu0 0.0
    %256 = vmatprep.subr.mxu0 0.0
    %257 = vmatpush2.msra.mxu0 0.0
    %258 = vmatprep.subr.mxu0 0.0
    %259 = vmatpush2.msra.mxu0 0.0
    %260 = vmatprep.subr.mxu0 0.0
    %261 = vmatpush2.msra.mxu0 0.0
    %262 = vmatprep.subr.mxu0 0.0
    %263 = vmatpush2.msra.mxu0 0.0
    %264 = vmatprep.subr.mxu0 0.0
    %265 = vmatpush2.msra.mxu0 0.0
    %266 = vmatprep.subr.mxu0 0.0
    %267 = vmatpush2.msra.mxu0 0.0
    %268 = vmatprep.subr.mxu0 0.0
    %269 = vmatpush2.msra.mxu0 0.0
    %270 = vmatprep.subr.mxu0 0.0
    %271 = vmatpush2.msra.mxu0 0.0
    %272 = vmatprep.subr.mxu0 0.0
    %273 = vmatpush2.msra.mxu0 0.0
    %274 = vmatprep.subr.mxu0 0.0
    %275 = vmatpush2.msra.mxu0 0.0
    %276 = vmatprep.subr.mxu0 0.0
    %277 = vmatpush2.msra.mxu0 0.0
    %278 = vmatprep.subr.mxu0 0.0
    %279 = vmatpush2.msra.mxu0 0.0
    %280 = vmatprep.subr.mxu0 0.0
    %281 = vmatpush2.msra.mxu0 0.0
    %282 = vmatprep.mubr.f32.mxu0 0.0
    %283 = vmatmul.mubr.f32.gmra.mxu0 %v200
    %v284 = vpop.f32.mrf.mxu0
    %v285 = vadd.f32 0.0, %v284
    %v286 = vpop.f32.mrf.mxu0
    %287 = vdwg.mxu0
    %288 = vst [vmem:[%s2] sm:$0xff] %v285
    // Predicated region
    $region14: #{mlp_forward.1} parent=1 // pred_check
      _
    $region15: #{mlp_forward.1} parent=1 // pred_check_branch
      %290 = sbr.rel (0) target = $region17
    $region16: #{mlp_forward.1} parent=1 // pred_region
      _
    $region17: #{mlp_forward.1} parent=1 // pred_fallthru
      _
    // Predicated region
    $region18: #{mlp_forward.1} parent=1 // pred_check
      _
    $region19: #{mlp_forward.1} parent=1 // pred_check_branch
      %292 = sbr.rel (0) target = $region21
    $region20: #{mlp_forward.1} parent=1 // pred_region
      _
    $region21: #{mlp_forward.1} parent=1 // pred_fallthru
      _
    %293 = vsyncpa [#allocation3], 1

</llo_original>
